<compile_context>
chip_gen: v7x
topology: tpu7x:2x2x1
jax: 0.10.0
libtpu: 0.0.40
codegen_flags: <defaults>
</compile_context>

<pallas_src>
import jax
import jax.numpy as jnp
from jax import lax
from jax.experimental import pallas as pl
from jax.experimental.pallas import tpu as pltpu

_SUB = 16  # sublane granularity for bf16 activation tiles


def _round_up(x, m):
    return ((x + m - 1) // m) * m


def critic_kernel(x_ref, w1_ref, b1_ref, w2_ref, b2_ref, w3_ref, b3_ref, o_ref):
    # fc1 + ReLU: bf16 MXU dot, f32 accumulate / bias / ReLU.
    h1 = jnp.dot(x_ref[...], w1_ref[...], preferred_element_type=jnp.float32)
    h1 = jnp.maximum(h1 + b1_ref[...], 0.0)
    # fc2 + ReLU.
    h2 = jnp.dot(h1.astype(jnp.bfloat16), w2_ref[...],
                 preferred_element_type=jnp.float32)
    h2 = jnp.maximum(h2 + b2_ref[...], 0.0)
    # fc_head: contract (1, hidden2) with (tb, hidden2) over hidden2 -> (1, tb).
    # Same A @ B^T MXU pattern as flash attention's q @ k^T; gives a
    # lane-dense output row directly.
    head = lax.dot_general(
        w3_ref[...], h2.astype(jnp.bfloat16),
        dimension_numbers=(((1,), (1,)), ((), ())),
        preferred_element_type=jnp.float32)
    o_ref[...] = (head + b3_ref[0, 0])[None]          # (1, 1, tb)


def critic_forward(xs, xo, params, *, block_b=1024):
    """xs: (B, nb_states), xo: (B, nb_obs). Returns (B, 1) state values."""
    # TODO(synk): PyTorch module's NaN check prints on host; no clean Pallas
    # equivalent, so it is omitted here.
    w1, b1, w2, b2, w3, b3 = params
    B = xs.shape[0]
    d_in = w1.shape[0]
    hidden1 = w1.shape[1]
    hidden2 = w2.shape[1]

    # Concat fc1 inputs in the wrapper (tiny HBM cost) so fc1 is a single MXU
    # dot; cast activations to bf16 for the MXU.
    x = jnp.concatenate([xs, xo], axis=1).astype(jnp.bfloat16)

    # Batch tile: multiple of 16 (bf16 sublane packing), capped at block_b and
    # at ceil(B/2) so the grid has >= 2 steps whenever possible, letting the
    # "parallel" batch axis occupy both v7x TensorCores.
    b_min = _round_up(B, _SUB)
    blk = _round_up(max(block_b, 1), _SUB)
    if b_min <= _SUB:
        tb = b_min
    else:
        tb = min(blk, _round_up(pl.cdiv(b_min, 2), _SUB))
    b_pad = _round_up(B, tb)
    if b_pad != B:
        x = jnp.pad(x, ((0, b_pad - B), (0, 0)))
    num_blocks = b_pad // tb

    w1b = w1.astype(jnp.bfloat16)
    w2b = w2.astype(jnp.bfloat16)
    w3b = w3.astype(jnp.bfloat16)
    b1f = b1.astype(jnp.float32)
    b2f = b2.astype(jnp.float32)
    b3f = b3.astype(jnp.float32)

    out = pl.pallas_call(
        critic_kernel,
        out_shape=jax.ShapeDtypeStruct((num_blocks, 1, tb), jnp.float32),
        grid=(num_blocks,),
        in_specs=[
            # streamed activations: one batch tile per grid step
            pl.BlockSpec((tb, d_in), lambda i: (i, 0)),
            # weights / biases: VMEM-resident across all grid steps
            pl.BlockSpec((d_in, hidden1), lambda i: (0, 0)),
            pl.BlockSpec((1, hidden1), lambda i: (0, 0)),
            pl.BlockSpec((hidden1, hidden2), lambda i: (0, 0)),
            pl.BlockSpec((1, hidden2), lambda i: (0, 0)),
            pl.BlockSpec((1, hidden2), lambda i: (0, 0)),
            # head bias: scalar in SMEM (avoids a padded VMEM tile)
            pl.BlockSpec(memory_space=pltpu.MemorySpace.SMEM),
        ],
        out_specs=pl.BlockSpec((1, 1, tb), lambda i: (i, 0, 0)),
        compiler_params=pltpu.CompilerParams(
            dimension_semantics=("parallel",),
        ),
    )(x, w1b, b1f, w2b, b2f, w3b, b3f)

    # Lane-dense (num_blocks, 1, tb) -> (B, 1); padded tail rows discarded.
    return out.reshape(-1)[:B].reshape(B, 1)


def init_params(key, nb_states, nb_obs, hidden1, hidden2, init_w=0.003):
    """Deterministic init mirroring the PyTorch module's init_weights.

    PyTorch quirk reproduced: fanin_init uses size[0] (= out_features) as the
    fan-in, so W1/W2 ~ U(-1/sqrt(out), 1/sqrt(out)). Biases keep nn.Linear's
    default U(-1/sqrt(in), 1/sqrt(in)). Head weight ~ U(-init_w, init_w).
    W1/W2 are stored transposed as (in, out); W3 as a (1, hidden2) row and b3
    as a (1, 1) scalar.
    """
    d_in = nb_states + nb_obs
    k = jax.random.split(key, 6)

    v1 = 1.0 / jnp.sqrt(jnp.float32(hidden1))        # fanin_init with size[0]=out
    w1 = jax.random.uniform(k[0], (d_in, hidden1), jnp.float32, -v1, v1)
    bb1 = 1.0 / jnp.sqrt(jnp.float32(d_in))
    b1 = jax.random.uniform(k[1], (1, hidden1), jnp.float32, -bb1, bb1)

    v2 = 1.0 / jnp.sqrt(jnp.float32(hidden2))
    w2 = jax.random.uniform(k[2], (hidden1, hidden2), jnp.float32, -v2, v2)
    bb2 = 1.0 / jnp.sqrt(jnp.float32(hidden1))
    b2 = jax.random.uniform(k[3], (1, hidden2), jnp.float32, -bb2, bb2)

    w3 = jax.random.uniform(k[4], (1, hidden2), jnp.float32, -init_w, init_w)
    bb3 = 1.0 / jnp.sqrt(jnp.float32(hidden2))
    b3 = jax.random.uniform(k[5], (1, 1), jnp.float32, -bb3, bb3)

    return (w1, b1, w2, b2, w3, b3)


def critic_reference(xs, xo, params):
    """Pure-JAX f32 reference for correctness checking."""
    w1, b1, w2, b2, w3, b3 = params
    x = jnp.concatenate([xs, xo], axis=1).astype(jnp.float32)
    h1 = jnp.maximum(x @ w1 + b1, 0.0)
    h2 = jnp.maximum(h1 @ w2 + b2, 0.0)
    return h2 @ w3.T + b3


if __name__ == "__main__":
    # Small shapes consistent with the module's forward.
    B, nb_states, nb_obs = 2, 4, 4
    hidden1, hidden2 = 32, 32

    key = jax.random.PRNGKey(0)
    kxs, kxo, kparams = jax.random.split(key, 3)
    xs = jax.random.normal(kxs, (B, nb_states), jnp.float32)
    xo = jax.random.normal(kxo, (B, nb_obs), jnp.float32)
    params = init_params(kparams, nb_states, nb_obs, hidden1, hidden2)

    out = jax.block_until_ready(critic_forward(xs, xo, params))
    ref = critic_reference(xs, xo, params)
    assert out.shape == (B, 1)
    # bf16 MXU operands -> looser tolerance vs. the f32 reference.
    assert jnp.allclose(out, ref, atol=1e-2, rtol=1e-2)

    # Ragged batch: auto split into >= 2 grid steps (v7x megacore) + tail pad.
    B2 = 37
    kxs2, kxo2 = jax.random.split(jax.random.PRNGKey(1), 2)
    xs2 = jax.random.normal(kxs2, (B2, nb_states), jnp.float32)
    xo2 = jax.random.normal(kxo2, (B2, nb_obs), jnp.float32)
    out2 = jax.block_until_ready(critic_forward(xs2, xo2, params))
    ref2 = critic_reference(xs2, xo2, params)
    assert out2.shape == (B2, 1)
    assert jnp.allclose(out2, ref2, atol=1e-2, rtol=1e-2)

    # User-capped small tile (exercises > 2 grid steps through the pipeline).
    out3 = jax.block_until_ready(critic_forward(xs2, xo2, params, block_b=16))
    assert out3.shape == (B2, 1)
    assert jnp.allclose(out3, ref2, atol=1e-2, rtol=1e-2)

    print("KERNEL_OK")
</pallas_src>

<mosaic_0001>
module attributes {stable_mosaic.version = 11 : i64} {
  func.func @critic_kernel(%arg0: i32, %arg1: memref<16x8xbf16, #tpu.memory_space<vmem>>, %arg2: memref<8x32xbf16, #tpu.memory_space<vmem>>, %arg3: memref<1x32xf32, #tpu.memory_space<vmem>>, %arg4: memref<32x32xbf16, #tpu.memory_space<vmem>>, %arg5: memref<1x32xf32, #tpu.memory_space<vmem>>, %arg6: memref<1x32xbf16, #tpu.memory_space<vmem>>, %arg7: memref<1x1xf32, #tpu.memory_space<smem>>, %arg8: memref<1x1x16xf32, #tpu.memory_space<vmem>>) attributes {dimension_semantics = [#tpu.dimension_semantics<parallel>], iteration_bounds = array<i64: 1>, scalar_prefetch = 0 : i64, scratch_operands = 0 : i64, tpu.core_type = #tpu.core_type<tc>, window_params = [{transform_indices = @transform_0, window_bounds = array<i64: 16, 8>}, {pipeline_mode = #tpu.pipeline_mode<synchronous>, transform_indices = @transform_1, window_bounds = array<i64: 8, 32>}, {pipeline_mode = #tpu.pipeline_mode<synchronous>, transform_indices = @transform_2, window_bounds = array<i64: 1, 32>}, {pipeline_mode = #tpu.pipeline_mode<synchronous>, transform_indices = @transform_3, window_bounds = array<i64: 32, 32>}, {pipeline_mode = #tpu.pipeline_mode<synchronous>, transform_indices = @transform_4, window_bounds = array<i64: 1, 32>}, {pipeline_mode = #tpu.pipeline_mode<synchronous>, transform_indices = @transform_5, window_bounds = array<i64: 1, 32>}, {transform_indices = @transform_6, window_bounds = array<i64: 1, 1>}, {transform_indices = @transform_7, window_bounds = array<i64: 1, 1, 16>}]} {
    %c0 = arith.constant 0 : index
    %c0_0 = arith.constant 0 : index
    %0 = vector.load %arg1[%c0, %c0_0] : memref<16x8xbf16, #tpu.memory_space<vmem>>, vector<16x8xbf16>
    %c0_1 = arith.constant 0 : index
    %c0_2 = arith.constant 0 : index
    %1 = vector.load %arg2[%c0_1, %c0_2] : memref<8x32xbf16, #tpu.memory_space<vmem>>, vector<8x32xbf16>
    %cst = arith.constant dense<0.000000e+00> : vector<16x32xf32>
    %2 = tpu.matmul %0, %1, %cst {dimension_numbers = #tpu.dot_dimension_numbers<[1], [0], [0], [1], [0, 0, 1, 1], [], []>} : vector<16x8xbf16>, vector<8x32xbf16>, vector<16x32xf32> -> vector<16x32xf32>
    %c0_3 = arith.constant 0 : index
    %c0_4 = arith.constant 0 : index
    %3 = vector.load %arg3[%c0_3, %c0_4] : memref<1x32xf32, #tpu.memory_space<vmem>>, vector<1x32xf32>
    %4 = vector.broadcast %3 : vector<1x32xf32> to vector<16x32xf32>
    %5 = arith.addf %2, %4 : vector<16x32xf32>
    %cst_5 = arith.constant 0.000000e+00 : f32
    %6 = vector.broadcast %cst_5 : f32 to vector<16x32xf32>
    %7 = arith.maximumf %5, %6 : vector<16x32xf32>
    %8 = arith.truncf %7 : vector<16x32xf32> to vector<16x32xbf16>
    %c0_6 = arith.constant 0 : index
    %c0_7 = arith.constant 0 : index
    %9 = vector.load %arg4[%c0_6, %c0_7] : memref<32x32xbf16, #tpu.memory_space<vmem>>, vector<32x32xbf16>
    %cst_8 = arith.constant dense<0.000000e+00> : vector<16x32xf32>
    %10 = tpu.matmul %8, %9, %cst_8 {dimension_numbers = #tpu.dot_dimension_numbers<[1], [0], [0], [1], [0, 0, 1, 1], [], []>} : vector<16x32xbf16>, vector<32x32xbf16>, vector<16x32xf32> -> vector<16x32xf32>
    %c0_9 = arith.constant 0 : index
    %c0_10 = arith.constant 0 : index
    %11 = vector.load %arg5[%c0_9, %c0_10] : memref<1x32xf32, #tpu.memory_space<vmem>>, vector<1x32xf32>
    %12 = vector.broadcast %11 : vector<1x32xf32> to vector<16x32xf32>
    %13 = arith.addf %10, %12 : vector<16x32xf32>
    %cst_11 = arith.constant 0.000000e+00 : f32
    %14 = vector.broadcast %cst_11 : f32 to vector<16x32xf32>
    %15 = arith.maximumf %13, %14 : vector<16x32xf32>
    %c0_12 = arith.constant 0 : index
    %c0_13 = arith.constant 0 : index
    %16 = vector.load %arg6[%c0_12, %c0_13] : memref<1x32xbf16, #tpu.memory_space<vmem>>, vector<1x32xbf16>
    %17 = arith.truncf %15 : vector<16x32xf32> to vector<16x32xbf16>
    %cst_14 = arith.constant dense<0.000000e+00> : vector<1x16xf32>
    %18 = tpu.matmul %16, %17, %cst_14 {dimension_numbers = #tpu.dot_dimension_numbers<[1], [1], [0], [0], [0, 0, 1, 0], [], []>} : vector<1x32xbf16>, vector<16x32xbf16>, vector<1x16xf32> -> vector<1x16xf32>
    %c0_15 = arith.constant 0 : index
    %c0_16 = arith.constant 0 : index
    %19 = memref.load %arg7[%c0_15, %c0_16] : memref<1x1xf32, #tpu.memory_space<smem>>
    %20 = vector.broadcast %19 : f32 to vector<1x16xf32>
    %21 = arith.addf %18, %20 : vector<1x16xf32>
    %22 = vector.shape_cast %21 : vector<1x16xf32> to vector<1x1x16xf32>
    %c0_17 = arith.constant 0 : index
    %c0_18 = arith.constant 0 : index
    %c0_19 = arith.constant 0 : index
    %23 = vector.load %arg8[%c0_17, %c0_18, %c0_19] : memref<1x1x16xf32, #tpu.memory_space<vmem>>, vector<1x1x16xf32>
    tpu.vector_store %arg8[%c0_17, %c0_18, %c0_19], %22 {strides = array<i32>} : memref<1x1x16xf32, #tpu.memory_space<vmem>>, vector<1x1x16xf32>,
    return
  }
  func.func @transform_0(%arg0: i32) -> (i32, i32) {
    %c0_i32 = arith.constant 0 : i32
    %c0_i32_0 = arith.constant 0 : i32
    return %arg0, %c0_i32 : i32, i32
  }
  func.func @transform_1(%arg0: i32) -> (i32, i32) {
    %c0_i32 = arith.constant 0 : i32
    %c0_i32_0 = arith.constant 0 : i32
    %c0_i32_1 = arith.constant 0 : i32
    return %c0_i32, %c0_i32_0 : i32, i32
  }
  func.func @transform_2(%arg0: i32) -> (i32, i32) {
    %c0_i32 = arith.constant 0 : i32
    %c0_i32_0 = arith.constant 0 : i32
    %c0_i32_1 = arith.constant 0 : i32
    return %c0_i32, %c0_i32_0 : i32, i32
  }
  func.func @transform_3(%arg0: i32) -> (i32, i32) {
    %c0_i32 = arith.constant 0 : i32
    %c0_i32_0 = arith.constant 0 : i32
    %c0_i32_1 = arith.constant 0 : i32
    return %c0_i32, %c0_i32_0 : i32, i32
  }
  func.func @transform_4(%arg0: i32) -> (i32, i32) {
    %c0_i32 = arith.constant 0 : i32
    %c0_i32_0 = arith.constant 0 : i32
    %c0_i32_1 = arith.constant 0 : i32
    return %c0_i32, %c0_i32_0 : i32, i32
  }
  func.func @transform_5(%arg0: i32) -> (i32, i32) {
    %c0_i32 = arith.constant 0 : i32
    %c0_i32_0 = arith.constant 0 : i32
    %c0_i32_1 = arith.constant 0 : i32
    return %c0_i32, %c0_i32_0 : i32, i32
  }
  func.func @transform_6(%arg0: i32) -> (i32, i32) {
    %c0_i32 = arith.constant 0 : i32
    %c0_i32_0 = arith.constant 0 : i32
    %c0_i32_1 = arith.constant 0 : i32
    return %c0_i32, %c0_i32_0 : i32, i32
  }
  func.func @transform_7(%arg0: i32) -> (i32, i32, i32) {
    %c0_i32 = arith.constant 0 : i32
    %c0_i32_0 = arith.constant 0 : i32
    %c0_i32_1 = arith.constant 0 : i32
    return %arg0, %c0_i32, %c0_i32_0 : i32, i32, i32
  }
}

</mosaic_0001>

<llo_original>
// kernel: tpu_custom_call.1
$region0: #{tpu_custom_call.1}
  #allocation0 [shape = 'u32[]', space=smem, size = 0x4, offset = 0x4, fixed_abs, tag = 'smem constant byte address 0x4 - core index']
  #allocation1 [shape = 'u32[144,128]{1,0:T(1,128)}', space=vmem, size = 0x12000, scoped, tag = 'internal scratch']
  #allocation2 [shape = 'f32[1,1]{1,0:T(1,128)S(6)}', space=smem, size = 0x200, scoped, tag = 'scoped memory for tpu_custom_call.1']
  %s0 = inlined_call_operand.vmem [shape: bf16[16,8], index: 0, kind: input, shape index: {}]
  %s1 = inlined_call_operand.vmem [shape: bf16[8,32], index: 1, kind: input, shape index: {}]
  %s2 = inlined_call_operand.vmem [shape: f32[1,32], index: 2, kind: input, shape index: {}]
  %s3 = inlined_call_operand.vmem [shape: bf16[32,32], index: 3, kind: input, shape index: {}]
  %s4 = inlined_call_operand.vmem [shape: f32[1,32], index: 4, kind: input, shape index: {}]
  %s5 = inlined_call_operand.vmem [shape: bf16[1,32], index: 5, kind: input, shape index: {}]
  %s6 = inlined_call_operand.<no memory space> [shape: f32[1,1], index: 6, kind: input, shape index: {}]
  %s7 = inlined_call_operand.hbm [shape: f32[1,1,16], index: 7, kind: output, shape index: {}]
  %s8 = sld [smem:[#allocation0]]
  $region38: #{tpu_custom_call.1} parent=0
    _
  %s10 = ssub.s32 1, %s8
  %s11 = scalar_select 0, %s10, %s8
  %12 = sst [smem:[#allocation2]] %s6
  $region1: #{tpu_custom_call.1} parent=0
    #allocation3 [shape = 'u8[512]{0}', space=vmem, size = 0x400, scoped, tag = 'output window, operand 0, single buffered']
    #allocation4 [shape = 's32[1]{0}', space=sflag, size = 0x4, scoped, tag = 'scoped memory for tpu_custom_call.1']
    %13 = vsyncpa [#allocation4], 0
    // Predicated region
    $region2: #{tpu_custom_call.1} parent=1 // pred_check
      _
    $region3: #{tpu_custom_call.1} parent=1 // pred_check_branch
      %15 = sbr.rel (0) target = $region5
    $region4: #{tpu_custom_call.1} parent=1 // pred_region
      _
    $region5: #{tpu_custom_call.1} parent=1 // pred_fallthru
      _
    // Predicated region
    $region6: #{tpu_custom_call.1} parent=1 // pred_check
      _
    $region7: #{tpu_custom_call.1} parent=1 // pred_check_branch
      %17 = sbr.rel (0) target = $region9
    $region8: #{tpu_custom_call.1} parent=1 // pred_region
      _
    $region9: #{tpu_custom_call.1} parent=1 // pred_fallthru
      _
    // Predicated region
    $region10: #{tpu_custom_call.1} parent=1 // pred_check
      _
    $region11: #{tpu_custom_call.1} parent=1 // pred_check_branch
      %19 = sbr.rel (0) target = $region13
    $region12: #{tpu_custom_call.1} parent=1 // pred_region
      _
    $region13: #{tpu_custom_call.1} parent=1 // pred_fallthru
      _
    // Predicated region
    $region14: #{tpu_custom_call.1} parent=1 // pred_check
      _
    $region15: #{tpu_custom_call.1} parent=1 // pred_check_branch
      %21 = sbr.rel (0) target = $region17
    $region16: #{tpu_custom_call.1} parent=1 // pred_region
      _
    $region17: #{tpu_custom_call.1} parent=1 // pred_fallthru
      _
    // Predicated region
    $region18: #{tpu_custom_call.1} parent=1 // pred_check
      _
    $region19: #{tpu_custom_call.1} parent=1 // pred_check_branch
      %23 = sbr.rel (0) target = $region21
    $region20: #{tpu_custom_call.1} parent=1 // pred_region
      _
    $region21: #{tpu_custom_call.1} parent=1 // pred_fallthru
      _
    // Predicated region
    $region22: #{tpu_custom_call.1} parent=1 // pred_check
      _
    $region23: #{tpu_custom_call.1} parent=1 // pred_check_branch
      %25 = sbr.rel (0) target = $region25
    $region24: #{tpu_custom_call.1} parent=1 // pred_region
      _
    $region25: #{tpu_custom_call.1} parent=1 // pred_fallthru
      _
    // Predicated region
    $region26: #{tpu_custom_call.1} parent=1 // pred_check
      _
    $region27: #{tpu_custom_call.1} parent=1 // pred_check_branch
      %27 = sbr.rel (0) target = $region29
    $region28: #{tpu_custom_call.1} parent=1 // pred_region
      _
    $region29: #{tpu_custom_call.1} parent=1 // pred_fallthru
      _
    %v29 = vld [vmem:[%s0] sm:$0xf]
    %v30 = vld [vmem:[%s0 + $0x4] sm:$0xf]
    %v31 = vld [vmem:[%s1] sm:$0xf]
    %v32 = vld [vmem:[%s2] sm:$0x1]
    %v34 = vlaneseq
    %v35 = vshrl.u32 %v34, 7
    %v36 = vsub.s32 0, %v35
    %v37 = vrot.slane %v32, %v36
    %v41 = vunpack.c.l.b16 %v29
    %v42 = vunpack.c.l.b16 %v30
    %v43 = vpack.c.b16 %v42, %v41
    %vm44 = vcmask 64512
    %v46 = vsel %vm44, %v43, 0
    %vm48 = vcmask 1043456
    %v50 = vsel %vm48, %v31, 0
    %52 = vmatprep.subr.bf16.mxu0 0
    %53 = vmatpush1.bf16.msra.mxu0 %v50
    %54 = vmatprep.subr.bf16.mxu0 0
    %55 = vmatpush1.bf16.msra.mxu0 0
    %56 = vmatprep.subr.bf16.mxu0 0
    %57 = vmatpush1.bf16.msra.mxu0 0
    %58 = vmatprep.subr.bf16.mxu0 0
    %59 = vmatpush1.bf16.msra.mxu0 0
    %60 = vmatprep.subr.bf16.mxu0 0
    %61 = vmatpush1.bf16.msra.mxu0 0
    %62 = vmatprep.subr.bf16.mxu0 0
    %63 = vmatpush1.bf16.msra.mxu0 0
    %64 = vmatprep.subr.bf16.mxu0 0
    %65 = vmatpush1.bf16.msra.mxu0 0
    %66 = vmatprep.subr.bf16.mxu0 0
    %67 = vmatpush1.bf16.msra.mxu0 0
    %68 = vmatprep.subr.bf16.mxu0 0
    %69 = vmatpush1.bf16.msra.mxu0 0
    %70 = vmatprep.subr.bf16.mxu0 0
    %71 = vmatpush1.bf16.msra.mxu0 0
    %72 = vmatprep.subr.bf16.mxu0 0
    %73 = vmatpush1.bf16.msra.mxu0 0
    %74 = vmatprep.subr.bf16.mxu0 0
    %75 = vmatpush1.bf16.msra.mxu0 0
    %76 = vmatprep.subr.bf16.mxu0 0
    %77 = vmatpush1.bf16.msra.mxu0 0
    %78 = vmatprep.subr.bf16.mxu0 0
    %79 = vmatpush1.bf16.msra.mxu0 0
    %80 = vmatprep.subr.bf16.mxu0 0
    %81 = vmatpush1.bf16.msra.mxu0 0
    %82 = vmatprep.subr.bf16.mxu0 0
    %83 = vmatpush1.bf16.msra.mxu0 0
    %84 = vmatprep.mubr.bf16.mxu0 0
    %85 = vmatmul.mubr.bf16.gmra.mrb[0].mxu0 %v46
    %v86 = vpop.f32.mrb[0].mxu0
    %v87 = vadd.f32 %v37, %v86
    %v88 = vpop.f32.mrb[0].mxu0
    %v89 = vpop.f32.mrb[0].mxu0
    %v90 = vadd.f32 %v37, %v89
    %v91 = vpop.f32.mrb[0].mxu0
    %92 = vdwg.mxu0
    %v93 = vmax.f32 %v87, 0.0
    %v94 = vmax.f32 %v90, 0.0
    %v95 = vpack.c.bf16 %v94, %v93
    %v96 = vld [vmem:[%s3] sm:$0xf]
    %v97 = vld [vmem:[%s3 + $0x4] sm:$0xf]
    %v98 = vld [vmem:[%s3 + $0x8] sm:$0xf]
    %v99 = vld [vmem:[%s3 + $0xc] sm:$0xf]
    %v100 = vld [vmem:[%s4] sm:$0x1]
    %v102 = vlaneseq
    %v103 = vshrl.u32 %v102, 7
    %v104 = vsub.s32 0, %v103
    %v105 = vrot.slane %v100, %v104
    %v111 = vunpack.c.l.b16 %v96
    %v112 = vunpack.c.l.b16 %v97
    %v113 = vunpack.c.l.b16 %v98
    %v114 = vunpack.c.l.b16 %v99
    %v115 = vpack.c.b16 %v112, %v111
    %v116 = vpack.c.b16 %v114, %v113
    %vm119 = vcmask 261120
    %v121 = vsel %vm119, %v95, 0
    %123 = vmatprep.subr.bf16.mxu0 0
    %124 = vmatpush1.bf16.msra.mxu0 %v115
    %125 = vmatprep.subr.bf16.mxu0 0
    %126 = vmatpush1.bf16.msra.mxu0 %v116
    %127 = vmatprep.subr.bf16.mxu0 0
    %128 = vmatpush1.bf16.msra.mxu0 0
    %129 = vmatprep.subr.bf16.mxu0 0
    %130 = vmatpush1.bf16.msra.mxu0 0
    %131 = vmatprep.subr.bf16.mxu0 0
    %132 = vmatpush1.bf16.msra.mxu0 0
    %133 = vmatprep.subr.bf16.mxu0 0
    %134 = vmatpush1.bf16.msra.mxu0 0
    %135 = vmatprep.subr.bf16.mxu0 0
    %136 = vmatpush1.bf16.msra.mxu0 0
    %137 = vmatprep.subr.bf16.mxu0 0
    %138 = vmatpush1.bf16.msra.mxu0 0
    %139 = vmatprep.subr.bf16.mxu0 0
    %140 = vmatpush1.bf16.msra.mxu0 0
    %141 = vmatprep.subr.bf16.mxu0 0
    %142 = vmatpush1.bf16.msra.mxu0 0
    %143 = vmatprep.subr.bf16.mxu0 0
    %144 = vmatpush1.bf16.msra.mxu0 0
    %145 = vmatprep.subr.bf16.mxu0 0
    %146 = vmatpush1.bf16.msra.mxu0 0
    %147 = vmatprep.subr.bf16.mxu0 0
    %148 = vmatpush1.bf16.msra.mxu0 0
    %149 = vmatprep.subr.bf16.mxu0 0
    %150 = vmatpush1.bf16.msra.mxu0 0
    %151 = vmatprep.subr.bf16.mxu0 0
    %152 = vmatpush1.bf16.msra.mxu0 0
    %153 = vmatprep.subr.bf16.mxu0 0
    %154 = vmatpush1.bf16.msra.mxu0 0
    %155 = vmatprep.mubr.bf16.mxu0 0
    %156 = vmatmul.mubr.bf16.gmra.mrb[0].mxu0 %v121
    %v157 = vpop.f32.mrb[0].mxu0
    %v158 = vadd.f32 %v105, %v157
    %v159 = vpop.f32.mrb[0].mxu0
    %v160 = vpop.f32.mrb[0].mxu0
    %v161 = vadd.f32 %v105, %v160
    %v162 = vpop.f32.mrb[0].mxu0
    %163 = vdwg.mxu0
    %v164 = vmax.f32 %v158, 0.0
    %v165 = vmax.f32 %v161, 0.0
    %v166 = vld [vmem:[%s5] sm:$0x1]
    %v167 = vpack.c.bf16 %v165, %v164
    %s168 = sld [smem:[#allocation2]]
    %v169 = vstv %s168
    %v171 = vsel %vm119, %v166, 0
    %v174 = vsel %vm119, %v167, 0
    %176 = vmatprep.subr.bf16.mxu0 0
    %177 = vmatpush1.bf16.xpose.msra.mxu0 %v174
    %178 = vmatprep.subr.bf16.mxu0 0
    %179 = vmatpush1.bf16.xpose.msra.mxu0 0
    %180 = vmatprep.subr.bf16.mxu0 0
    %181 = vmatpush1.bf16.xpose.msra.mxu0 0
    %182 = vmatprep.subr.bf16.mxu0 0
    %183 = vmatpush1.bf16.xpose.msra.mxu0 0
    %184 = vmatprep.subr.bf16.mxu0 0
    %185 = vmatpush1.bf16.xpose.msra.mxu0 0
    %186 = vmatprep.subr.bf16.mxu0 0
    %187 = vmatpush1.bf16.xpose.msra.mxu0 0
    %188 = vmatprep.subr.bf16.mxu0 0
    %189 = vmatpush1.bf16.xpose.msra.mxu0 0
    %190 = vmatprep.subr.bf16.mxu0 0
    %191 = vmatpush1.bf16.xpose.msra.mxu0 0
    %192 = vmatprep.subr.bf16.mxu0 0
    %193 = vmatpush1.bf16.xpose.msra.mxu0 0
    %194 = vmatprep.subr.bf16.mxu0 0
    %195 = vmatpush1.bf16.xpose.msra.mxu0 0
    %196 = vmatprep.subr.bf16.mxu0 0
    %197 = vmatpush1.bf16.xpose.msra.mxu0 0
    %198 = vmatprep.subr.bf16.mxu0 0
    %199 = vmatpush1.bf16.xpose.msra.mxu0 0
    %200 = vmatprep.subr.bf16.mxu0 0
    %201 = vmatpush1.bf16.xpose.msra.mxu0 0
    %202 = vmatprep.subr.bf16.mxu0 0
    %203 = vmatpush1.bf16.xpose.msra.mxu0 0
    %204 = vmatprep.subr.bf16.mxu0 0
    %205 = vmatpush1.bf16.xpose.msra.mxu0 0
    %206 = vmatprep.subr.bf16.mxu0 0
    %207 = vmatpush1.bf16.xpose.msra.mxu0 0
    %208 = vmatprep.mubr.bf16.mxu0 0
    %209 = vmatmul.mubr.bf16.gmra.mrb[0].mxu0 %v171
    %v210 = vpop.f32.mrb[0].mxu0
    %v211 = vadd.f32 %v169, %v210
    %v212 = vpop.f32.mrb[0].mxu0
    %v213 = vpop.f32.mrb[0].mxu0
    %v214 = vpop.f32.mrb[0].mxu0
    %215 = vdwg.mxu0
    %vm216 = vcmask 122880
    %217 = vst.msk [vmem:[#allocation3] sm:$0x1] %vm216, %v211
    // Predicated region
    $region30: #{tpu_custom_call.1} parent=1 // pred_check
      _
    $region31: #{tpu_custom_call.1} parent=1 // pred_check_branch
      %219 = sbr.rel (0) target = $region33
    $region32: #{tpu_custom_call.1} parent=1 // pred_region
      %s221 = ssub.s32 16, 16
      %222 = vsyncadd [#allocation4], %s221
      %s224 = sshll.u32 [#allocation3], 4
      %s225 = int_to_ptr.vmem [resolvable:$true] %s224
      %227 = dma.vmem_to_hbm [thread:$0]  %s225, 16, %s7, [#allocation4]
    $region33: #{tpu_custom_call.1} parent=1 // pred_fallthru
      _
    // Predicated region
    $region34: #{tpu_custom_call.1} parent=1 // pred_check
      _
    $region35: #{tpu_custom_call.1} parent=1 // pred_check_branch
      %229 = sbr.rel (0) target = $region37
    $region36: #{tpu_custom_call.1} parent=1 // pred_region
      %230 = dma.done [#allocation4], 16
    $region37: #{tpu_custom_call.1} parent=1 // pred_fallthru
      _
    %231 = vsyncpa [#allocation4], 1

</llo_original>
